<compile_context>
chip_gen: v7x
topology: tpu7x:2x2x1
jax: 0.10.0
libtpu: 0.0.40
codegen_flags: <defaults>
</compile_context>

<pallas_src>
import math

import jax
import jax.numpy as jnp
from jax.experimental import pallas as pl
from jax.experimental.pallas import tpu as pltpu


def _round_up(x, m):
    return ((x + m - 1) // m) * m


def _double_ft_slice_kernel(idx0_ref, val0_ref, idx1_ref, val1_ref,
                            w_ref, b_ref, out0_ref, out1_ref, acc_ref):
    ni_chunk = w_ref.shape[0]
    tb, k_feats = idx0_ref.shape
    kstep = pl.program_id(1)

    @pl.when(kstep == 0)
    def _init():
        acc_ref[...] = jnp.zeros_like(acc_ref)

    # Global column indices covered by this chunk of num_inputs.
    base = kstep * ni_chunk
    col = jax.lax.broadcasted_iota(jnp.int32, (1, ni_chunk), 1) + base

    # Fuse the two slices into one (2*tb, ni_chunk) scatter matrix so a single
    # MXU matmul serves both outputs.
    idx = jnp.concatenate([idx0_ref[...], idx1_ref[...]], axis=0)  # (2*tb, K)
    val = jnp.concatenate([val0_ref[...], val1_ref[...]], axis=0)  # (2*tb, K)

    # M[b, i] = sum_k val[b, k] * (idx[b, k] == base + i)
    # Padding (-1) indices and indices outside this chunk never match, so they
    # contribute zero — matching the CUDA kernel's skip behaviour.  K is small
    # and static; compare+select accumulation keeps this a short VALU chain on
    # a bounded (2*tb, ni_chunk) temporary.
    m = jnp.zeros((2 * tb, ni_chunk), jnp.float32)
    for kk in range(k_feats):
        hit = idx[:, kk:kk + 1] == col                       # (2*tb, ni_chunk)
        m = m + jnp.where(hit, val[:, kk:kk + 1], 0.0)

    acc_ref[...] += jnp.dot(m, w_ref[...], preferred_element_type=jnp.float32)

    @pl.when(kstep == pl.num_programs(1) - 1)
    def _finalize():
        bias = b_ref[...]          # (1, num_outputs_padded), broadcasts
        acc = acc_ref[...]
        out0_ref[...] = acc[:tb, :] + bias
        out1_ref[...] = acc[tb:, :] + bias


def double_feature_transformer_slice(feature_indices_0, feature_values_0,
                                     feature_indices_1, feature_values_1,
                                     weight, bias, *,
                                     batch_tile=256, input_tile=None,
                                     resident_weight_budget=24 << 20):
    assert feature_indices_0.dtype == jnp.int32
    assert feature_values_0.dtype == jnp.float32
    assert feature_indices_1.dtype == jnp.int32
    assert feature_values_1.dtype == jnp.float32
    assert weight.dtype == jnp.float32 and bias.dtype == jnp.float32
    assert feature_indices_0.shape == feature_values_0.shape
    assert feature_indices_1.shape == feature_values_1.shape
    assert feature_indices_0.shape == feature_indices_1.shape

    batch, k_feats = feature_indices_0.shape
    num_inputs, num_outputs = weight.shape
    assert bias.shape == (num_outputs,)

    # ---- tile sizes & padding (wrapper absorbs alignment constraints) ----
    tb = min(_round_up(batch_tile, 8), _round_up(batch, 8))   # sublane-aligned
    batch_pad = _round_up(batch, tb)
    no_pad = _round_up(num_outputs, 128)                      # lane-dense stores
    ni_full = _round_up(num_inputs, 8)

    if input_tile is None:
        # If the whole (double-buffered) weight fits under the budget, keep it
        # VMEM-resident: its BlockSpec index never changes so it is fetched
        # from HBM exactly once for the whole call.  Otherwise stream chunks.
        if 2 * ni_full * no_pad * 4 <= resident_weight_budget:
            ni_tile = ni_full
        else:
            ni_tile = min(512, ni_full)
    else:
        ni_tile = min(_round_up(input_tile, 8), ni_full)
    ni_pad = _round_up(num_inputs, ni_tile)

    def pad_feats(fi, fv):
        if batch_pad != batch:
            fi = jnp.pad(fi, ((0, batch_pad - batch), (0, 0)), constant_values=-1)
            fv = jnp.pad(fv, ((0, batch_pad - batch), (0, 0)))
        return fi, fv

    fi0p, fv0p = pad_feats(feature_indices_0, feature_values_0)
    fi1p, fv1p = pad_feats(feature_indices_1, feature_values_1)

    w = weight
    if (ni_pad, no_pad) != (num_inputs, num_outputs):
        w = jnp.pad(weight, ((0, ni_pad - num_inputs), (0, no_pad - num_outputs)))
    b2 = bias.reshape(1, num_outputs)
    if no_pad != num_outputs:
        b2 = jnp.pad(b2, ((0, 0), (0, no_pad - num_outputs)))

    n_btiles = batch_pad // tb
    n_kchunks = ni_pad // ni_tile
    grid = (n_btiles, n_kchunks)   # (parallel batch, arbitrary reduction)

    feat_spec = pl.BlockSpec((tb, k_feats), lambda i, k: (i, 0))
    w_spec = pl.BlockSpec((ni_tile, no_pad), lambda i, k: (k, 0))
    b_spec = pl.BlockSpec((1, no_pad), lambda i, k: (0, 0))
    out_spec = pl.BlockSpec((tb, no_pad), lambda i, k: (i, 0))

    # ---- explicit VMEM budget (double-buffered tiles + accumulator + temps) ----
    fbytes = 4 * (tb * k_feats * 4) * 2            # 4 feature tiles, x2 buffers
    wbytes = ni_tile * no_pad * 4 * 2
    bbytes = no_pad * 4 * 2
    obytes = 2 * (tb * no_pad * 4) * 2             # 2 outputs, x2 buffers
    accbytes = 2 * tb * no_pad * 4
    mbytes = 2 * tb * ni_tile * 4                  # scatter-matrix temporary
    footprint = fbytes + wbytes + bbytes + obytes + accbytes + mbytes
    # Cap at 64 MiB so the same budget is valid on v7x (64 MiB VMEM per TC).
    vmem_limit = min(64 << 20, max(int(1.5 * footprint) + (4 << 20), 16 << 20))

    # Weight is read once if resident (single chunk), else once per batch tile.
    w_reads = 1 if n_kchunks == 1 else n_btiles
    cost = pl.CostEstimate(
        flops=2 * (2 * batch_pad) * ni_pad * no_pad
              + 3 * (2 * batch_pad) * k_feats * ni_pad,
        transcendentals=0,
        bytes_accessed=w_reads * ni_pad * no_pad * 4
                       + 4 * batch_pad * k_feats * 4
                       + 2 * batch_pad * no_pad * 4)

    out0, out1 = pl.pallas_call(
        _double_ft_slice_kernel,
        out_shape=(jax.ShapeDtypeStruct((batch_pad, no_pad), jnp.float32),
                   jax.ShapeDtypeStruct((batch_pad, no_pad), jnp.float32)),
        grid_spec=pltpu.PrefetchScalarGridSpec(
            num_scalar_prefetch=0,
            grid=grid,
            in_specs=[feat_spec, feat_spec, feat_spec, feat_spec, w_spec, b_spec],
            out_specs=[out_spec, out_spec],
            scratch_shapes=[pltpu.VMEM((2 * tb, no_pad), jnp.float32)]),
        compiler_params=pltpu.CompilerParams(
            dimension_semantics=("parallel", "arbitrary"),
            vmem_limit_bytes=vmem_limit),
        cost_estimate=cost,
    )(fi0p, fv0p, fi1p, fv1p, w, b2)

    return out0[:batch, :num_outputs], out1[:batch, :num_outputs]


def _reference(fi0, fv0, fi1, fv1, weight, bias):
    def one(fi, fv):
        gathered = weight[jnp.clip(fi, 0, weight.shape[0] - 1)]  # (B, K, N)
        mask = (fi >= 0).astype(jnp.float32)
        contrib = gathered * (fv * mask)[..., None]
        return contrib.sum(axis=1) + bias[None, :]
    return one(fi0, fv0), one(fi1, fv1)


if __name__ == "__main__":
    key = jax.random.PRNGKey(0)
    k_w, k_b, k_i0, k_v0, k_i1, k_v1, k_m0, k_m1 = jax.random.split(key, 8)

    # Small shapes consistent with the module's forward; chosen so that the
    # wrapper's batch / num_inputs / num_outputs padding paths and the
    # multi-chunk reduction axis are all exercised.
    batch = 24
    max_active_features = 8
    num_inputs = 80
    num_outputs = 96

    sigma = math.sqrt(1.0 / num_inputs)
    weight = jax.random.uniform(k_w, (num_inputs, num_outputs), jnp.float32,
                                minval=-sigma, maxval=sigma)
    bias = jax.random.uniform(k_b, (num_outputs,), jnp.float32,
                              minval=-sigma, maxval=sigma)

    fi0 = jax.random.randint(k_i0, (batch, max_active_features), 0, num_inputs,
                             dtype=jnp.int32)
    fi1 = jax.random.randint(k_i1, (batch, max_active_features), 0, num_inputs,
                             dtype=jnp.int32)
    # sprinkle some -1 padding entries (skipped, as in the CUDA kernel)
    pad0 = jax.random.bernoulli(k_m0, 0.25, (batch, max_active_features))
    pad1 = jax.random.bernoulli(k_m1, 0.25, (batch, max_active_features))
    fi0 = jnp.where(pad0, jnp.int32(-1), fi0)
    fi1 = jnp.where(pad1, jnp.int32(-1), fi1)

    fv0 = jax.random.uniform(k_v0, (batch, max_active_features), jnp.float32)
    fv1 = jax.random.uniform(k_v1, (batch, max_active_features), jnp.float32)

    ref0, ref1 = _reference(fi0, fv0, fi1, fv1, weight, bias)

    # Path 1: small explicit tiles so both grid axes take multiple steps
    # (streamed-weight / chunked-reduction code path).
    out0, out1 = double_feature_transformer_slice(
        fi0, fv0, fi1, fv1, weight, bias, batch_tile=16, input_tile=32)
    jax.block_until_ready((out0, out1))
    assert out0.shape == (batch, num_outputs) and out0.dtype == jnp.float32
    assert out1.shape == (batch, num_outputs) and out1.dtype == jnp.float32
    assert jnp.allclose(out0, ref0, atol=1e-5, rtol=1e-5)
    assert jnp.allclose(out1, ref1, atol=1e-5, rtol=1e-5)

    # Path 2: default (auto) tiling — VMEM-resident weight, single reduction
    # step; this is the production fast path for moderate weight sizes.
    out0a, out1a = double_feature_transformer_slice(
        fi0, fv0, fi1, fv1, weight, bias)
    jax.block_until_ready((out0a, out1a))
    assert jnp.allclose(out0a, ref0, atol=1e-5, rtol=1e-5)
    assert jnp.allclose(out1a, ref1, atol=1e-5, rtol=1e-5)

    print("KERNEL_OK")
</pallas_src>

<mosaic_0001>
module attributes {stable_mosaic.version = 11 : i64} {
  func.func @_double_ft_slice_kernel(%arg0: i32, %arg1: i32, %arg2: memref<16x8xi32, #tpu.memory_space<vmem>>, %arg3: memref<16x8xf32, #tpu.memory_space<vmem>>, %arg4: memref<16x8xi32, #tpu.memory_space<vmem>>, %arg5: memref<16x8xf32, #tpu.memory_space<vmem>>, %arg6: memref<32x128xf32, #tpu.memory_space<vmem>>, %arg7: memref<1x128xf32, #tpu.memory_space<vmem>>, %arg8: memref<16x128xf32, #tpu.memory_space<vmem>>, %arg9: memref<16x128xf32, #tpu.memory_space<vmem>>, %arg10: memref<32x128xf32, #tpu.memory_space<vmem>>) attributes {dimension_semantics = [#tpu.dimension_semantics<parallel>, #tpu.dimension_semantics<arbitrary>], iteration_bounds = array<i64: 2, 3>, scalar_prefetch = 0 : i64, scratch_operands = 1 : i64, tpu.core_type = #tpu.core_type<tc>, window_params = [{transform_indices = @transform_0, window_bounds = array<i64: 16, 8>}, {transform_indices = @transform_1, window_bounds = array<i64: 16, 8>}, {transform_indices = @transform_2, window_bounds = array<i64: 16, 8>}, {transform_indices = @transform_3, window_bounds = array<i64: 16, 8>}, {transform_indices = @transform_4, window_bounds = array<i64: 32, 128>}, {pipeline_mode = #tpu.pipeline_mode<synchronous>, transform_indices = @transform_5, window_bounds = array<i64: 1, 128>}, {transform_indices = @transform_6, window_bounds = array<i64: 16, 128>}, {transform_indices = @transform_7, window_bounds = array<i64: 16, 128>}]} {
    %c0_i32 = arith.constant 0 : i32
    %0 = arith.cmpi eq, %arg1, %c0_i32 : i32
    %1 = arith.extui %0 : i1 to i32
    %c0_i32_0 = arith.constant 0 : i32
    %2 = arith.cmpi ne, %1, %c0_i32_0 : i32
    scf.if %2 {
      %cst_24 = arith.constant 0.000000e+00 : f32
      %102 = vector.broadcast %cst_24 : f32 to vector<32x128xf32>
      %c0_25 = arith.constant 0 : index
      %c0_26 = arith.constant 0 : index
      %103 = vector.load %arg10[%c0_25, %c0_26] : memref<32x128xf32, #tpu.memory_space<vmem>>, vector<32x128xf32>
      tpu.vector_store %arg10[%c0_25, %c0_26], %102 {strides = array<i32>} : memref<32x128xf32, #tpu.memory_space<vmem>>, vector<32x128xf32>,
    } else {
    }
    %c32_i32 = arith.constant 32 : i32
    %3 = arith.muli %arg1, %c32_i32 : i32
    %4 = tpu.iota {dimensions = array<i32: 1>} : vector<1x32xi32>
    %5 = vector.broadcast %3 : i32 to vector<1x32xi32>
    %6 = arith.addi %4, %5 : vector<1x32xi32>
    %c0 = arith.constant 0 : index
    %c0_1 = arith.constant 0 : index
    %7 = vector.load %arg2[%c0, %c0_1] : memref<16x8xi32, #tpu.memory_space<vmem>>, vector<16x8xi32>
    %c0_2 = arith.constant 0 : index
    %c0_3 = arith.constant 0 : index
    %8 = vector.load %arg4[%c0_2, %c0_3] : memref<16x8xi32, #tpu.memory_space<vmem>>, vector<16x8xi32>
    %9 = tpu.concatenate %7, %8 in 0 : vector<16x8xi32>, vector<16x8xi32> -> vector<32x8xi32>
    %c0_4 = arith.constant 0 : index
    %c0_5 = arith.constant 0 : index
    %10 = vector.load %arg3[%c0_4, %c0_5] : memref<16x8xf32, #tpu.memory_space<vmem>>, vector<16x8xf32>
    %c0_6 = arith.constant 0 : index
    %c0_7 = arith.constant 0 : index
    %11 = vector.load %arg5[%c0_6, %c0_7] : memref<16x8xf32, #tpu.memory_space<vmem>>, vector<16x8xf32>
    %12 = tpu.concatenate %10, %11 in 0 : vector<16x8xf32>, vector<16x8xf32> -> vector<32x8xf32>
    %cst = arith.constant 0.000000e+00 : f32
    %13 = vector.broadcast %cst : f32 to vector<32x32xf32>
    %14 = vector.extract_strided_slice %9 {offsets = [0, 0], sizes = [32, 1], strides = [1, 1]} : vector<32x8xi32> to vector<32x1xi32>
    %15 = vector.broadcast %14 : vector<32x1xi32> to vector<32x32xi32>
    %16 = vector.broadcast %6 : vector<1x32xi32> to vector<32x32xi32>
    %17 = arith.cmpi eq, %15, %16 : vector<32x32xi32>
    %18 = vector.extract_strided_slice %12 {offsets = [0, 0], sizes = [32, 1], strides = [1, 1]} : vector<32x8xf32> to vector<32x1xf32>
    %cst_8 = arith.constant 0.000000e+00 : f32
    %19 = vector.shape_cast %18 : vector<32x1xf32> to vector<32x1xf32>
    %20 = vector.broadcast %19 : vector<32x1xf32> to vector<32x32xf32>
    %21 = vector.broadcast %cst_8 : f32 to vector<32x32xf32>
    %22 = arith.select %17, %20, %21 : vector<32x32xi1>, vector<32x32xf32>
    %23 = arith.addf %13, %22 : vector<32x32xf32>
    %24 = vector.extract_strided_slice %9 {offsets = [0, 1], sizes = [32, 1], strides = [1, 1]} : vector<32x8xi32> to vector<32x1xi32>
    %25 = vector.broadcast %24 : vector<32x1xi32> to vector<32x32xi32>
    %26 = vector.broadcast %6 : vector<1x32xi32> to vector<32x32xi32>
    %27 = arith.cmpi eq, %25, %26 : vector<32x32xi32>
    %28 = vector.extract_strided_slice %12 {offsets = [0, 1], sizes = [32, 1], strides = [1, 1]} : vector<32x8xf32> to vector<32x1xf32>
    %cst_9 = arith.constant 0.000000e+00 : f32
    %29 = vector.shape_cast %28 : vector<32x1xf32> to vector<32x1xf32>
    %30 = vector.broadcast %29 : vector<32x1xf32> to vector<32x32xf32>
    %31 = vector.broadcast %cst_9 : f32 to vector<32x32xf32>
    %32 = arith.select %27, %30, %31 : vector<32x32xi1>, vector<32x32xf32>
    %33 = arith.addf %23, %32 : vector<32x32xf32>
    %34 = vector.extract_strided_slice %9 {offsets = [0, 2], sizes = [32, 1], strides = [1, 1]} : vector<32x8xi32> to vector<32x1xi32>
    %35 = vector.broadcast %34 : vector<32x1xi32> to vector<32x32xi32>
    %36 = vector.broadcast %6 : vector<1x32xi32> to vector<32x32xi32>
    %37 = arith.cmpi eq, %35, %36 : vector<32x32xi32>
    %38 = vector.extract_strided_slice %12 {offsets = [0, 2], sizes = [32, 1], strides = [1, 1]} : vector<32x8xf32> to vector<32x1xf32>
    %cst_10 = arith.constant 0.000000e+00 : f32
    %39 = vector.shape_cast %38 : vector<32x1xf32> to vector<32x1xf32>
    %40 = vector.broadcast %39 : vector<32x1xf32> to vector<32x32xf32>
    %41 = vector.broadcast %cst_10 : f32 to vector<32x32xf32>
    %42 = arith.select %37, %40, %41 : vector<32x32xi1>, vector<32x32xf32>
    %43 = arith.addf %33, %42 : vector<32x32xf32>
    %44 = vector.extract_strided_slice %9 {offsets = [0, 3], sizes = [32, 1], strides = [1, 1]} : vector<32x8xi32> to vector<32x1xi32>
    %45 = vector.broadcast %44 : vector<32x1xi32> to vector<32x32xi32>
    %46 = vector.broadcast %6 : vector<1x32xi32> to vector<32x32xi32>
    %47 = arith.cmpi eq, %45, %46 : vector<32x32xi32>
    %48 = vector.extract_strided_slice %12 {offsets = [0, 3], sizes = [32, 1], strides = [1, 1]} : vector<32x8xf32> to vector<32x1xf32>
    %cst_11 = arith.constant 0.000000e+00 : f32
    %49 = vector.shape_cast %48 : vector<32x1xf32> to vector<32x1xf32>
    %50 = vector.broadcast %49 : vector<32x1xf32> to vector<32x32xf32>
    %51 = vector.broadcast %cst_11 : f32 to vector<32x32xf32>
    %52 = arith.select %47, %50, %51 : vector<32x32xi1>, vector<32x32xf32>
    %53 = arith.addf %43, %52 : vector<32x32xf32>
    %54 = vector.extract_strided_slice %9 {offsets = [0, 4], sizes = [32, 1], strides = [1, 1]} : vector<32x8xi32> to vector<32x1xi32>
    %55 = vector.broadcast %54 : vector<32x1xi32> to vector<32x32xi32>
    %56 = vector.broadcast %6 : vector<1x32xi32> to vector<32x32xi32>
    %57 = arith.cmpi eq, %55, %56 : vector<32x32xi32>
    %58 = vector.extract_strided_slice %12 {offsets = [0, 4], sizes = [32, 1], strides = [1, 1]} : vector<32x8xf32> to vector<32x1xf32>
    %cst_12 = arith.constant 0.000000e+00 : f32
    %59 = vector.shape_cast %58 : vector<32x1xf32> to vector<32x1xf32>
    %60 = vector.broadcast %59 : vector<32x1xf32> to vector<32x32xf32>
    %61 = vector.broadcast %cst_12 : f32 to vector<32x32xf32>
    %62 = arith.select %57, %60, %61 : vector<32x32xi1>, vector<32x32xf32>
    %63 = arith.addf %53, %62 : vector<32x32xf32>
    %64 = vector.extract_strided_slice %9 {offsets = [0, 5], sizes = [32, 1], strides = [1, 1]} : vector<32x8xi32> to vector<32x1xi32>
    %65 = vector.broadcast %64 : vector<32x1xi32> to vector<32x32xi32>
    %66 = vector.broadcast %6 : vector<1x32xi32> to vector<32x32xi32>
    %67 = arith.cmpi eq, %65, %66 : vector<32x32xi32>
    %68 = vector.extract_strided_slice %12 {offsets = [0, 5], sizes = [32, 1], strides = [1, 1]} : vector<32x8xf32> to vector<32x1xf32>
    %cst_13 = arith.constant 0.000000e+00 : f32
    %69 = vector.shape_cast %68 : vector<32x1xf32> to vector<32x1xf32>
    %70 = vector.broadcast %69 : vector<32x1xf32> to vector<32x32xf32>
    %71 = vector.broadcast %cst_13 : f32 to vector<32x32xf32>
    %72 = arith.select %67, %70, %71 : vector<32x32xi1>, vector<32x32xf32>
    %73 = arith.addf %63, %72 : vector<32x32xf32>
    %74 = vector.extract_strided_slice %9 {offsets = [0, 6], sizes = [32, 1], strides = [1, 1]} : vector<32x8xi32> to vector<32x1xi32>
    %75 = vector.broadcast %74 : vector<32x1xi32> to vector<32x32xi32>
    %76 = vector.broadcast %6 : vector<1x32xi32> to vector<32x32xi32>
    %77 = arith.cmpi eq, %75, %76 : vector<32x32xi32>
    %78 = vector.extract_strided_slice %12 {offsets = [0, 6], sizes = [32, 1], strides = [1, 1]} : vector<32x8xf32> to vector<32x1xf32>
    %cst_14 = arith.constant 0.000000e+00 : f32
    %79 = vector.shape_cast %78 : vector<32x1xf32> to vector<32x1xf32>
    %80 = vector.broadcast %79 : vector<32x1xf32> to vector<32x32xf32>
    %81 = vector.broadcast %cst_14 : f32 to vector<32x32xf32>
    %82 = arith.select %77, %80, %81 : vector<32x32xi1>, vector<32x32xf32>
    %83 = arith.addf %73, %82 : vector<32x32xf32>
    %84 = vector.extract_strided_slice %9 {offsets = [0, 7], sizes = [32, 1], strides = [1, 1]} : vector<32x8xi32> to vector<32x1xi32>
    %85 = vector.broadcast %84 : vector<32x1xi32> to vector<32x32xi32>
    %86 = vector.broadcast %6 : vector<1x32xi32> to vector<32x32xi32>
    %87 = arith.cmpi eq, %85, %86 : vector<32x32xi32>
    %88 = vector.extract_strided_slice %12 {offsets = [0, 7], sizes = [32, 1], strides = [1, 1]} : vector<32x8xf32> to vector<32x1xf32>
    %cst_15 = arith.constant 0.000000e+00 : f32
    %89 = vector.shape_cast %88 : vector<32x1xf32> to vector<32x1xf32>
    %90 = vector.broadcast %89 : vector<32x1xf32> to vector<32x32xf32>
    %91 = vector.broadcast %cst_15 : f32 to vector<32x32xf32>
    %92 = arith.select %87, %90, %91 : vector<32x32xi1>, vector<32x32xf32>
    %93 = arith.addf %83, %92 : vector<32x32xf32>
    %c0_16 = arith.constant 0 : index
    %c0_17 = arith.constant 0 : index
    %94 = vector.load %arg10[%c0_16, %c0_17] : memref<32x128xf32, #tpu.memory_space<vmem>>, vector<32x128xf32>
    %c0_18 = arith.constant 0 : index
    %c0_19 = arith.constant 0 : index
    %95 = vector.load %arg6[%c0_18, %c0_19] : memref<32x128xf32, #tpu.memory_space<vmem>>, vector<32x128xf32>
    %cst_20 = arith.constant dense<0.000000e+00> : vector<32x128xf32>
    %96 = tpu.matmul %93, %95, %cst_20 {dimension_numbers = #tpu.dot_dimension_numbers<[1], [0], [0], [1], [0, 0, 1, 1], [], []>} : vector<32x32xf32>, vector<32x128xf32>, vector<32x128xf32> -> vector<32x128xf32>
    %97 = arith.addf %94, %96 : vector<32x128xf32>
    %c0_21 = arith.constant 0 : index
    %c0_22 = arith.constant 0 : index
    %98 = vector.load %arg10[%c0_21, %c0_22] : memref<32x128xf32, #tpu.memory_space<vmem>>, vector<32x128xf32>
    tpu.vector_store %arg10[%c0_21, %c0_22], %97 {strides = array<i32>} : memref<32x128xf32, #tpu.memory_space<vmem>>, vector<32x128xf32>,
    %c2_i32 = arith.constant 2 : i32
    %99 = arith.cmpi eq, %arg1, %c2_i32 : i32
    %100 = arith.extui %99 : i1 to i32
    %c0_i32_23 = arith.constant 0 : i32
    %101 = arith.cmpi ne, %100, %c0_i32_23 : i32
    scf.if %101 {
      %c0_24 = arith.constant 0 : index
      %c0_25 = arith.constant 0 : index
      %102 = vector.load %arg7[%c0_24, %c0_25] : memref<1x128xf32, #tpu.memory_space<vmem>>, vector<1x128xf32>
      %c0_26 = arith.constant 0 : index
      %c0_27 = arith.constant 0 : index
      %103 = vector.load %arg10[%c0_26, %c0_27] : memref<32x128xf32, #tpu.memory_space<vmem>>, vector<32x128xf32>
      %104 = vector.extract_strided_slice %103 {offsets = [0, 0], sizes = [16, 128], strides = [1, 1]} : vector<32x128xf32> to vector<16x128xf32>
      %105 = vector.broadcast %102 : vector<1x128xf32> to vector<16x128xf32>
      %106 = arith.addf %104, %105 : vector<16x128xf32>
      %c0_28 = arith.constant 0 : index
      %c0_29 = arith.constant 0 : index
      %107 = vector.load %arg8[%c0_28, %c0_29] : memref<16x128xf32, #tpu.memory_space<vmem>>, vector<16x128xf32>
      tpu.vector_store %arg8[%c0_28, %c0_29], %106 {strides = array<i32>} : memref<16x128xf32, #tpu.memory_space<vmem>>, vector<16x128xf32>,
      %108 = vector.extract_strided_slice %103 {offsets = [16, 0], sizes = [16, 128], strides = [1, 1]} : vector<32x128xf32> to vector<16x128xf32>
      %109 = vector.broadcast %102 : vector<1x128xf32> to vector<16x128xf32>
      %110 = arith.addf %108, %109 : vector<16x128xf32>
      %c0_30 = arith.constant 0 : index
      %c0_31 = arith.constant 0 : index
      %111 = vector.load %arg9[%c0_30, %c0_31] : memref<16x128xf32, #tpu.memory_space<vmem>>, vector<16x128xf32>
      tpu.vector_store %arg9[%c0_30, %c0_31], %110 {strides = array<i32>} : memref<16x128xf32, #tpu.memory_space<vmem>>, vector<16x128xf32>,
    } else {
    }
    return
  }
  func.func @transform_0(%arg0: i32, %arg1: i32) -> (i32, i32) {
    %c0_i32 = arith.constant 0 : i32
    %c0_i32_0 = arith.constant 0 : i32
    return %arg0, %c0_i32 : i32, i32
  }
  func.func @transform_1(%arg0: i32, %arg1: i32) -> (i32, i32) {
    %c0_i32 = arith.constant 0 : i32
    %c0_i32_0 = arith.constant 0 : i32
    return %arg0, %c0_i32 : i32, i32
  }
  func.func @transform_2(%arg0: i32, %arg1: i32) -> (i32, i32) {
    %c0_i32 = arith.constant 0 : i32
    %c0_i32_0 = arith.constant 0 : i32
    return %arg0, %c0_i32 : i32, i32
  }
  func.func @transform_3(%arg0: i32, %arg1: i32) -> (i32, i32) {
    %c0_i32 = arith.constant 0 : i32
    %c0_i32_0 = arith.constant 0 : i32
    return %arg0, %c0_i32 : i32, i32
  }
  func.func @transform_4(%arg0: i32, %arg1: i32) -> (i32, i32) {
    %c0_i32 = arith.constant 0 : i32
    %c0_i32_0 = arith.constant 0 : i32
    return %arg1, %c0_i32 : i32, i32
  }
  func.func @transform_5(%arg0: i32, %arg1: i32) -> (i32, i32) {
    %c0_i32 = arith.constant 0 : i32
    %c0_i32_0 = arith.constant 0 : i32
    %c0_i32_1 = arith.constant 0 : i32
    return %c0_i32, %c0_i32_0 : i32, i32
  }
  func.func @transform_6(%arg0: i32, %arg1: i32) -> (i32, i32) {
    %c0_i32 = arith.constant 0 : i32
    %c0_i32_0 = arith.constant 0 : i32
    return %arg0, %c0_i32 : i32, i32
  }
  func.func @transform_7(%arg0: i32, %arg1: i32) -> (i32, i32) {
    %c0_i32 = arith.constant 0 : i32
    %c0_i32_0 = arith.constant 0 : i32
    return %arg0, %c0_i32 : i32, i32
  }
}

</mosaic_0001>

<llo_original>
// kernel: tpu_custom_call.1
$region0: #{tpu_custom_call.1}
  #allocation0 [shape = 'u32[]', space=smem, size = 0x4, offset = 0x4, fixed_abs, tag = 'smem constant byte address 0x4 - core index']
  #allocation1 [shape = 'u32[144,128]{1,0:T(1,128)}', space=vmem, size = 0x12000, scoped, tag = 'internal scratch']
  #allocation2 [shape = 'f32[32,128]{1,0:T(8,128)}', space=vmem, size = 0x4000, scoped, tag = 'scratch operand']
  %s0 = inlined_call_operand.vmem [shape: s32[32,8], index: 0, kind: input, shape index: {}]
  %s1 = inlined_call_operand.vmem [shape: f32[32,8], index: 1, kind: input, shape index: {}]
  %s2 = inlined_call_operand.vmem [shape: s32[32,8], index: 2, kind: input, shape index: {}]
  %s3 = inlined_call_operand.vmem [shape: f32[32,8], index: 3, kind: input, shape index: {}]
  %s4 = inlined_call_operand.vmem [shape: f32[96,128], index: 4, kind: input, shape index: {}]
  %s5 = inlined_call_operand.vmem [shape: f32[1,128], index: 5, kind: input, shape index: {}]
  %s6 = inlined_call_operand.hbm [shape: f32[32,128], index: 6, kind: output, shape index: {0}]
  %s7 = inlined_call_operand.hbm [shape: f32[32,128], index: 7, kind: output, shape index: {1}]
  %8 = xla_tuple %s6, %s7
  %s9 = sld [smem:[#allocation0]]
  $region73: #{tpu_custom_call.1} parent=0
    _
  %s11 = ssub.s32 1, %s9
  %s12 = scalar_select 0, %s11, %s9
  $region1: #{tpu_custom_call.1} parent=0
    #allocation3 [shape = 'u8[16384]{0}', space=vmem, size = 0x4000, scoped, tag = 'output window, operand 0']
    #allocation4 [shape = 's32[2]{0}', space=sflag, size = 0x8, scoped, tag = 'scoped memory for tpu_custom_call.1']
    #allocation5 [shape = 'u8[16384]{0}', space=vmem, size = 0x4000, scoped, tag = 'output window, operand 1']
    #allocation6 [shape = 's32[2]{0}', space=sflag, size = 0x8, scoped, tag = 'scoped memory for tpu_custom_call.1']
    %13 = vsyncpa [#allocation4], 0
    %s14 = scalar_lea.sflag [#allocation4], 1
    %15 = vsyncpa %s14, 0
    %16 = vsyncpa [#allocation6], 0
    %s17 = scalar_lea.sflag [#allocation6], 1
    %18 = vsyncpa %s17, 0
    loop: start=0, step=1, limit=8
    $region2: #{tpu_custom_call.1} parent=1 // loop_pre_header
      _
    $region3: #{tpu_custom_call.1} parent=1 // loop_header
      %s20 = sphi 0, %s24
      %p21 = scmp.ge.s32.totalorder %s20, 8
      %s27 = sphi 0, %s39
      %s28 = sphi 0, %s35
      %s29 = sphi 0, %s27
      %s30 = sphi 0, %s28
      %s31 = sphi 0, %s29
      %s32 = sphi 0, %s30
      %s42 = sphi 0, %s44
      %s45 = sphi 0, %s42
      %s46 = sphi 0, %s45
      %s62 = sphi 0, %s46
      %s68 = sphi 0, %s70
      %s71 = sphi 0, %s68
      %s72 = sphi 0, %s71
      %s88 = sphi 0, %s72
      %s94 = sphi 0, %s96
      %s97 = sphi 0, %s94
      %s98 = sphi 0, %s97
      %s114 = sphi 0, %s98
      %s120 = sphi 0, %s122
      %s123 = sphi 0, %s120
      %s124 = sphi 0, %s123
      %s140 = sphi 0, %s124
      %s146 = sphi 0, %s148
      %s149 = sphi 0, %s146
      %s150 = sphi 0, %s149
      %s166 = sphi 0, %s150
      %s170 = sphi 0, %s170
      %s172 = sphi 0, %s170
      %s173 = sphi 0, %s172
      %s187 = sphi 0, %s173
      %s193 = sphi 0, %s195
      %s196 = sphi 0, %s193
      %s197 = sphi 0, %s196
      %s213 = sphi 0, %s197
      %s219 = sphi 0, %s221
      %s222 = sphi 0, %s219
      %s223 = sphi 0, %s222
      %s239 = sphi 0, %s223
    $region4: #{tpu_custom_call.1} parent=1 // loop_header_branch
      %23 = sbr.rel (%p21) target = $region8
    $region5: #{tpu_custom_call.1} parent=1 // loop_body
      %s25 = ssub.s32 %s20, 1
      %s26 = ssub.s32 %s20, 2
      %s33 = sadd.s32 1, %s28
      %p34 = scmp.ge.s32.totalorder %s33, 3
      %s35 = scalar_select %p34, 0, %s33
      %s36 = sadd.s32 1, %s27
      %s37 = scalar_select %p34, %s36, %s27
      %p38 = scmp.ge.s32.totalorder %s37, 2
      %s39 = scalar_select %p38, 0, %s37
      %s40 = ssub.s32 %s27, %s39
      %p41 = scmp.eq.s32.totalorder %s40, 0
      %s43 = sadd.s32 %s42, 1
      %s44 = scalar_select %p41, %s42, %s43
      %p47 = pneg %p41
      %p48 = scmp.eq.s32.totalorder %s20, 5
      %p49 = por %p47, %p48
      %p50 = scmp.ne.s32.totalorder %s42, %s45
      %p51 = scmp.eq.s32.totalorder %s20, 0
      %p52 = por %p50, %p51
      %p53 = scmp.ne.s32.totalorder %s42, %s45
      %p54 = scmp.eq.s32.totalorder %s25, 5
      %p55 = por %p53, %p54
      %p56 = scmp.ne.s32.totalorder %s45, %s46
      %p57 = scmp.eq.s32.totalorder %s25, 0
      %p58 = por %p56, %p57
      %p59 = scmp.ne.s32.totalorder %s45, %s46
      %p60 = scmp.eq.s32.totalorder %s26, 5
      %p61 = por %p59, %p60
      %p63 = scmp.ne.s32.totalorder %s46, %s62
      %p64 = scmp.eq.s32.totalorder %s26, 0
      %p65 = por %p63, %p64
      %s66 = ssub.s32 %s27, %s39
      %p67 = scmp.eq.s32.totalorder %s66, 0
      %s69 = sadd.s32 %s68, 1
      %s70 = scalar_select %p67, %s68, %s69
      %p73 = pneg %p67
      %p74 = scmp.eq.s32.totalorder %s20, 5
      %p75 = por %p73, %p74
      %p76 = scmp.ne.s32.totalorder %s68, %s71
      %p77 = scmp.eq.s32.totalorder %s20, 0
      %p78 = por %p76, %p77
      %p79 = scmp.ne.s32.totalorder %s68, %s71
      %p80 = scmp.eq.s32.totalorder %s25, 5
      %p81 = por %p79, %p80
      %p82 = scmp.ne.s32.totalorder %s71, %s72
      %p83 = scmp.eq.s32.totalorder %s25, 0
      %p84 = por %p82, %p83
      %p85 = scmp.ne.s32.totalorder %s71, %s72
      %p86 = scmp.eq.s32.totalorder %s26, 5
      %p87 = por %p85, %p86
      %p89 = scmp.ne.s32.totalorder %s72, %s88
      %p90 = scmp.eq.s32.totalorder %s26, 0
      %p91 = por %p89, %p90
      %s92 = ssub.s32 %s27, %s39
      %p93 = scmp.eq.s32.totalorder %s92, 0
      %s95 = sadd.s32 %s94, 1
      %s96 = scalar_select %p93, %s94, %s95
      %p99 = pneg %p93
      %p100 = scmp.eq.s32.totalorder %s20, 5
      %p101 = por %p99, %p100
      %p102 = scmp.ne.s32.totalorder %s94, %s97
      %p103 = scmp.eq.s32.totalorder %s20, 0
      %p104 = por %p102, %p103
      %p105 = scmp.ne.s32.totalorder %s94, %s97
      %p106 = scmp.eq.s32.totalorder %s25, 5
      %p107 = por %p105, %p106
      %p108 = scmp.ne.s32.totalorder %s97, %s98
      %p109 = scmp.eq.s32.totalorder %s25, 0
      %p110 = por %p108, %p109
      %p111 = scmp.ne.s32.totalorder %s97, %s98
      %p112 = scmp.eq.s32.totalorder %s26, 5
      %p113 = por %p111, %p112
      %p115 = scmp.ne.s32.totalorder %s98, %s114
      %p116 = scmp.eq.s32.totalorder %s26, 0
      %p117 = por %p115, %p116
      %s118 = ssub.s32 %s27, %s39
      %p119 = scmp.eq.s32.totalorder %s118, 0
      %s121 = sadd.s32 %s120, 1
      %s122 = scalar_select %p119, %s120, %s121
      %p125 = pneg %p119
      %p126 = scmp.eq.s32.totalorder %s20, 5
      %p127 = por %p125, %p126
      %p128 = scmp.ne.s32.totalorder %s120, %s123
      %p129 = scmp.eq.s32.totalorder %s20, 0
      %p130 = por %p128, %p129
      %p131 = scmp.ne.s32.totalorder %s120, %s123
      %p132 = scmp.eq.s32.totalorder %s25, 5
      %p133 = por %p131, %p132
      %p134 = scmp.ne.s32.totalorder %s123, %s124
      %p135 = scmp.eq.s32.totalorder %s25, 0
      %p136 = por %p134, %p135
      %p137 = scmp.ne.s32.totalorder %s123, %s124
      %p138 = scmp.eq.s32.totalorder %s26, 5
      %p139 = por %p137, %p138
      %p141 = scmp.ne.s32.totalorder %s124, %s140
      %p142 = scmp.eq.s32.totalorder %s26, 0
      %p143 = por %p141, %p142
      %s144 = ssub.s32 %s28, %s35
      %p145 = scmp.eq.s32.totalorder %s144, 0
      %s147 = sadd.s32 %s146, 1
      %s148 = scalar_select %p145, %s146, %s147
      %p151 = pneg %p145
      %p152 = scmp.eq.s32.totalorder %s20, 5
      %p153 = por %p151, %p152
      %p154 = scmp.ne.s32.totalorder %s146, %s149
      %p155 = scmp.eq.s32.totalorder %s20, 0
      %p156 = por %p154, %p155
      %p157 = scmp.ne.s32.totalorder %s146, %s149
      %p158 = scmp.eq.s32.totalorder %s25, 5
      %p159 = por %p157, %p158
      %p160 = scmp.ne.s32.totalorder %s149, %s150
      %p161 = scmp.eq.s32.totalorder %s25, 0
      %p162 = por %p160, %p161
      %p163 = scmp.ne.s32.totalorder %s149, %s150
      %p164 = scmp.eq.s32.totalorder %s26, 5
      %p165 = por %p163, %p164
      %p167 = scmp.ne.s32.totalorder %s150, %s166
      %p168 = scmp.eq.s32.totalorder %s26, 0
      %p169 = por %p167, %p168
      %s171 = sadd.s32 %s170, 1
      %p174 = scmp.eq.s32.totalorder %s20, 5
      %p175 = scmp.ne.s32.totalorder %s170, %s172
      %p176 = scmp.eq.s32.totalorder %s20, 0
      %p177 = por %p175, %p176
      %p178 = scmp.ne.s32.totalorder %s170, %s172
      %p179 = scmp.eq.s32.totalorder %s25, 5
      %p180 = por %p178, %p179
      %p181 = scmp.ne.s32.totalorder %s172, %s173
      %p182 = scmp.eq.s32.totalorder %s25, 0
      %p183 = por %p181, %p182
      %p184 = scmp.ne.s32.totalorder %s172, %s173
      %p185 = scmp.eq.s32.totalorder %s26, 5
      %p186 = por %p184, %p185
      %p188 = scmp.ne.s32.totalorder %s173, %s187
      %p189 = scmp.eq.s32.totalorder %s26, 0
      %p190 = por %p188, %p189
      %s191 = ssub.s32 %s27, %s39
      %p192 = scmp.eq.s32.totalorder %s191, 0
      %s194 = sadd.s32 %s193, 1
      %s195 = scalar_select %p192, %s193, %s194
      %p198 = pneg %p192
      %p199 = scmp.eq.s32.totalorder %s20, 5
      %p200 = por %p198, %p199
      %p201 = scmp.ne.s32.totalorder %s193, %s196
      %p202 = scmp.eq.s32.totalorder %s20, 0
      %p203 = por %p201, %p202
      %p204 = scmp.ne.s32.totalorder %s193, %s196
      %p205 = scmp.eq.s32.totalorder %s25, 5
      %p206 = por %p204, %p205
      %p207 = scmp.ne.s32.totalorder %s196, %s197
      %p208 = scmp.eq.s32.totalorder %s25, 0
      %p209 = por %p207, %p208
      %p210 = scmp.ne.s32.totalorder %s196, %s197
      %p211 = scmp.eq.s32.totalorder %s26, 5
      %p212 = por %p210, %p211
      %p214 = scmp.ne.s32.totalorder %s197, %s213
      %p215 = scmp.eq.s32.totalorder %s26, 0
      %p216 = por %p214, %p215
      %s217 = ssub.s32 %s27, %s39
      %p218 = scmp.eq.s32.totalorder %s217, 0
      %s220 = sadd.s32 %s219, 1
      %s221 = scalar_select %p218, %s219, %s220
      %p224 = pneg %p218
      %p225 = scmp.eq.s32.totalorder %s20, 5
      %p226 = por %p224, %p225
      %p227 = scmp.ne.s32.totalorder %s219, %s222
      %p228 = scmp.eq.s32.totalorder %s20, 0
      %p229 = por %p227, %p228
      %p230 = scmp.ne.s32.totalorder %s219, %s222
      %p231 = scmp.eq.s32.totalorder %s25, 5
      %p232 = por %p230, %p231
      %p233 = scmp.ne.s32.totalorder %s222, %s223
      %p234 = scmp.eq.s32.totalorder %s25, 0
      %p235 = por %p233, %p234
      %p236 = scmp.ne.s32.totalorder %s222, %s223
      %p237 = scmp.eq.s32.totalorder %s26, 5
      %p238 = por %p236, %p237
      %p240 = scmp.ne.s32.totalorder %s223, %s239
      %p241 = scmp.eq.s32.totalorder %s26, 0
      %p242 = por %p240, %p241
      %p243 = scmp.le.s32.totalorder 1, %s20
      %p244 = scmp.lt.s32.totalorder %s20, 7
      %p245 = pnand %p243, %p244
      %p246 = pneg %p245
      // Predicated region
      $region9: #{tpu_custom_call.1} parent=5 // pred_check
        _
      $region10: #{tpu_custom_call.1} parent=5 // pred_check_branch
        %248 = sbr.rel (%p245) target = $region12
      $region11: #{tpu_custom_call.1} parent=5 // pred_region
        %s249 = ssub.s32 %s20, 1
        // Predicated region
        $region13: #{tpu_custom_call.1} parent=11 // pred_check
          %p250 = pneg %p183
        $region14: #{tpu_custom_call.1} parent=11 // pred_check_branch
          %252 = sbr.rel (%p250) target = $region16
        $region15: #{tpu_custom_call.1} parent=11 // pred_region
          _
        $region16: #{tpu_custom_call.1} parent=11 // pred_fallthru
          _
      $region12: #{tpu_custom_call.1} parent=5 // pred_fallthru
        _
      %p253 = scmp.lt.s32.totalorder %s20, 6
      // Predicated region
      $region17: #{tpu_custom_call.1} parent=5 // pred_check
        %p254 = pneg %p253
      $region18: #{tpu_custom_call.1} parent=5 // pred_check_branch
        %256 = sbr.rel (%p254) target = $region20
      $region19: #{tpu_custom_call.1} parent=5 // pred_region
        // Predicated region
        $region21: #{tpu_custom_call.1} parent=19 // pred_check
          %p257 = pneg %p52
        $region22: #{tpu_custom_call.1} parent=19 // pred_check_branch
          %259 = sbr.rel (%p257) target = $region24
        $region23: #{tpu_custom_call.1} parent=19 // pred_region
          %s260 = smul.u32 2, %s27
          %p261 = scmp.lt.s32.totalorder %s260, 3
          %s262 = scalar_select %p261, %s260, 3
          %s263 = smul.addr %s262, 8
          %s264 = scalar_lea.vmem %s0, %s263
          %s265 = smul.u32 2, %s27
        $region24: #{tpu_custom_call.1} parent=19 // pred_fallthru
          _
        // Predicated region
        $region25: #{tpu_custom_call.1} parent=19 // pred_check
          %p266 = pneg %p78
        $region26: #{tpu_custom_call.1} parent=19 // pred_check_branch
          %268 = sbr.rel (%p266) target = $region28
        $region27: #{tpu_custom_call.1} parent=19 // pred_region
          %s269 = smul.u32 2, %s27
          %p270 = scmp.lt.s32.totalorder %s269, 3
          %s271 = scalar_select %p270, %s269, 3
          %s272 = smul.addr %s271, 8
          %s273 = scalar_lea.vmem %s1, %s272
          %s274 = smul.u32 2, %s27
        $region28: #{tpu_custom_call.1} parent=19 // pred_fallthru
          _
        // Predicated region
        $region29: #{tpu_custom_call.1} parent=19 // pred_check
          %p275 = pneg %p104
        $region30: #{tpu_custom_call.1} parent=19 // pred_check_branch
          %277 = sbr.rel (%p275) target = $region32
        $region31: #{tpu_custom_call.1} parent=19 // pred_region
          %s278 = smul.u32 2, %s27
          %p279 = scmp.lt.s32.totalorder %s278, 3
          %s280 = scalar_select %p279, %s278, 3
          %s281 = smul.addr %s280, 8
          %s282 = scalar_lea.vmem %s2, %s281
          %s283 = smul.u32 2, %s27
        $region32: #{tpu_custom_call.1} parent=19 // pred_fallthru
          _
        // Predicated region
        $region33: #{tpu_custom_call.1} parent=19 // pred_check
          %p284 = pneg %p130
        $region34: #{tpu_custom_call.1} parent=19 // pred_check_branch
          %286 = sbr.rel (%p284) target = $region36
        $region35: #{tpu_custom_call.1} parent=19 // pred_region
          %s287 = smul.u32 2, %s27
          %p288 = scmp.lt.s32.totalorder %s287, 3
          %s289 = scalar_select %p288, %s287, 3
          %s290 = smul.addr %s289, 8
          %s291 = scalar_lea.vmem %s3, %s290
          %s292 = smul.u32 2, %s27
        $region36: #{tpu_custom_call.1} parent=19 // pred_fallthru
          _
        // Predicated region
        $region37: #{tpu_custom_call.1} parent=19 // pred_check
          %p293 = pneg %p156
        $region38: #{tpu_custom_call.1} parent=19 // pred_check_branch
          %295 = sbr.rel (%p293) target = $region40
        $region39: #{tpu_custom_call.1} parent=19 // pred_region
          %s296 = smul.u32 4, %s28
          %p297 = scmp.lt.s32.totalorder %s296, 11
          %s298 = scalar_select %p297, %s296, 11
          %s299 = smul.addr %s298, 8
          %s300 = scalar_lea.vmem %s4, %s299
          %s301 = smul.u32 4, %s28
        $region40: #{tpu_custom_call.1} parent=19 // pred_fallthru
          _
      $region20: #{tpu_custom_call.1} parent=5 // pred_fallthru
        _
      %p302 = scmp.le.s32.totalorder 1, %s20
      %p303 = scmp.lt.s32.totalorder %s20, 7
      %p304 = pnand %p302, %p303
      %p305 = pneg %p304
      // Predicated region
      $region41: #{tpu_custom_call.1} parent=5 // pred_check
        _
      $region42: #{tpu_custom_call.1} parent=5 // pred_check_branch
        %307 = sbr.rel (%p304) target = $region44
      $region43: #{tpu_custom_call.1} parent=5 // pred_region
        %s308 = ssub.s32 %s20, 1
        %s309 = smul.u32 2, %s29
        %p310 = scmp.lt.s32.totalorder %s309, 3
        %s311 = scalar_select %p310, %s309, 3
        %s312 = smul.addr %s311, 8
        %s313 = scalar_lea.vmem %s0, %s312
        %p314 = pneg %p58
        %p315 = pneg %p55
        %s316 = smul.u32 2, %s29
        %p317 = scmp.lt.s32.totalorder %s316, 3
        %s318 = scalar_select %p317, %s316, 3
        %s319 = smul.addr %s318, 8
        %s320 = scalar_lea.vmem %s1, %s319
        %p321 = pneg %p84
        %p322 = pneg %p81
        %s323 = smul.u32 2, %s29
        %p324 = scmp.lt.s32.totalorder %s323, 3
        %s325 = scalar_select %p324, %s323, 3
        %s326 = smul.addr %s325, 8
        %s327 = scalar_lea.vmem %s2, %s326
        %p328 = pneg %p110
        %p329 = pneg %p107
        %s330 = smul.u32 2, %s29
        %p331 = scmp.lt.s32.totalorder %s330, 3
        %s332 = scalar_select %p331, %s330, 3
        %s333 = smul.addr %s332, 8
        %s334 = scalar_lea.vmem %s3, %s333
        %p335 = pneg %p136
        %p336 = pneg %p133
        %s337 = smul.u32 4, %s30
        %p338 = scmp.lt.s32.totalorder %s337, 11
        %s339 = scalar_select %p338, %s337, 11
        %s340 = smul.addr %s339, 8
        %s341 = scalar_lea.vmem %s4, %s340
        %p342 = pneg %p162
        %p343 = pneg %p159
        %p344 = pneg %p183
        %p345 = pneg %p180
        %p346 = pneg %p209
        %p347 = pneg %p206
        %s348 = sand.u32 %s196, 1
        %s349 = scalar_lea.sflag [#allocation4], %s348
        %s350 = sand.u32 %s196, 1
        %s351 = smul.addr %s350, 16
        %s352 = scalar_lea.vmem [#allocation3], %s351
        %p353 = pneg %p235
        %p354 = pneg %p232
        %s355 = sand.u32 %s222, 1
        %s356 = scalar_lea.sflag [#allocation6], %s355
        %s357 = sand.u32 %s222, 1
        %s358 = smul.addr %s357, 16
        %s359 = scalar_lea.vmem [#allocation5], %s358
        %s360 = smul.u32 2, %s29
        %p361 = scmp.lt.s32.totalorder %s360, 3
        %s362 = scalar_select %p361, %s360, 3
        %s363 = smul.addr %s362, 8
        %s364 = scalar_lea.vmem %s0, %s363
        %s365 = smul.u32 2, %s29
        %s366 = smul.u32 2, %s29
        %p367 = scmp.lt.s32.totalorder %s366, 3
        %s368 = scalar_select %p367, %s366, 3
        %s369 = smul.addr %s368, 8
        %s370 = scalar_lea.vmem %s1, %s369
        %s371 = smul.u32 2, %s29
        %s372 = smul.u32 2, %s29
        %p373 = scmp.lt.s32.totalorder %s372, 3
        %s374 = scalar_select %p373, %s372, 3
        %s375 = smul.addr %s374, 8
        %s376 = scalar_lea.vmem %s2, %s375
        %s377 = smul.u32 2, %s29
        %s378 = smul.u32 2, %s29
        %p379 = scmp.lt.s32.totalorder %s378, 3
        %s380 = scalar_select %p379, %s378, 3
        %s381 = smul.addr %s380, 8
        %s382 = scalar_lea.vmem %s3, %s381
        %s383 = smul.u32 2, %s29
        %s384 = smul.u32 4, %s30
        %p385 = scmp.lt.s32.totalorder %s384, 11
        %s386 = scalar_select %p385, %s384, 11
        %s387 = smul.addr %s386, 8
        %s388 = scalar_lea.vmem %s4, %s387
        %s389 = smul.u32 4, %s30
        %s390 = smul.u32 2, %s29
        %s391 = smul.u32 2, %s29
        %p392 = scmp.eq.s32.totalorder %s30, 0
        // Predicated region
        $region45: #{tpu_custom_call.1} parent=43 // pred_check
          %p393 = pneg %p392
        $region46: #{tpu_custom_call.1} parent=43 // pred_check_branch
          %395 = sbr.rel (%p393) target = $region48
        $region47: #{tpu_custom_call.1} parent=43 // pred_region
          %396 = vst [vmem:[#allocation2] sm:$0xff] 0.0
          %397 = vst [vmem:[#allocation2 + $0x8] sm:$0xff] 0.0
          %398 = vst [vmem:[#allocation2 + $0x10] sm:$0xff] 0.0
          %399 = vst [vmem:[#allocation2 + $0x18] sm:$0xff] 0.0
        $region48: #{tpu_custom_call.1} parent=43 // pred_fallthru
          _
        %s400 = smul.u32 %s30, 32
        %v401 = vlaneseq
        %v402 = vand.u32 %v401, 127
        %v403 = vstv %s400
        %v404 = vadd.s32 %v402, %v403
        %v405 = vld [vmem:[%s364] sm:$0xff]
        %v406 = vld [vmem:[%s364 + $0x8] sm:$0xff]
        %v407 = vld [vmem:[%s376] sm:$0xff]
        %v408 = vld [vmem:[%s376 + $0x8] sm:$0xff]
        %v409 = vld [vmem:[%s370] sm:$0xff]
        %v410 = vld [vmem:[%s370 + $0x8] sm:$0xff]
        %v411 = vld [vmem:[%s382] sm:$0xff]
        %v412 = vld [vmem:[%s382 + $0x8] sm:$0xff]
        %413 = vset.pattern.permute.xlu0 0
        %414 = vperm.xlu0 %413, %v405
        %v415 = vpop.permute.xlu0 %414
        %416 = vset.pattern.permute.xlu0 0
        %417 = vperm.xlu0 %416, %v406
        %v418 = vpop.permute.xlu0 %417
        %419 = vset.pattern.permute.xlu0 0
        %420 = vperm.xlu0 %419, %v407
        %v421 = vpop.permute.xlu0 %420
        %422 = vset.pattern.permute.xlu0 0
        %423 = vperm.xlu0 %422, %v408
        %v424 = vpop.permute.xlu0 %423
        %vm425 = vcmp.eq.s32.totalorder %v415, %v404
        %vm426 = vcmp.eq.s32.totalorder %v418, %v404
        %vm427 = vcmp.eq.s32.totalorder %v421, %v404
        %vm428 = vcmp.eq.s32.totalorder %v424, %v404
        %430 = vset.pattern.permute.xlu0 0
        %431 = vperm.xlu0 %430, %v409
        %v432 = vpop.permute.xlu0 %431
        %435 = vset.pattern.permute.xlu0 0
        %436 = vperm.xlu0 %435, %v410
        %v437 = vpop.permute.xlu0 %436
        %440 = vset.pattern.permute.xlu0 0
        %441 = vperm.xlu0 %440, %v411
        %v442 = vpop.permute.xlu0 %441
        %445 = vset.pattern.permute.xlu0 0
        %446 = vperm.xlu0 %445, %v412
        %v447 = vpop.permute.xlu0 %446
        %v449 = vsel %vm425, %v432, 0.0
        %v450 = vsel %vm426, %v437, 0.0
        %v451 = vsel %vm427, %v442, 0.0
        %v452 = vsel %vm428, %v447, 0.0
        %v453 = vadd.f32 %v449, 0.0
        %v454 = vadd.f32 %v450, 0.0
        %v455 = vadd.f32 %v451, 0.0
        %v456 = vadd.f32 %v452, 0.0
        %457 = vset.pattern.permute.xlu0 1
        %458 = vperm.xlu0 %457, %v405
        %v459 = vpop.permute.xlu0 %458
        %460 = vset.pattern.permute.xlu0 1
        %461 = vperm.xlu0 %460, %v406
        %v462 = vpop.permute.xlu0 %461
        %463 = vset.pattern.permute.xlu0 1
        %464 = vperm.xlu0 %463, %v407
        %v465 = vpop.permute.xlu0 %464
        %466 = vset.pattern.permute.xlu0 1
        %467 = vperm.xlu0 %466, %v408
        %v468 = vpop.permute.xlu0 %467
        %vm469 = vcmp.eq.s32.totalorder %v459, %v404
        %vm470 = vcmp.eq.s32.totalorder %v462, %v404
        %vm471 = vcmp.eq.s32.totalorder %v465, %v404
        %vm472 = vcmp.eq.s32.totalorder %v468, %v404
        %473 = vset.pattern.permute.xlu0 1
        %474 = vperm.xlu0 %473, %v409
        %v475 = vpop.permute.xlu0 %474
        %477 = vset.pattern.permute.xlu0 1
        %478 = vperm.xlu0 %477, %v410
        %v479 = vpop.permute.xlu0 %478
        %481 = vset.pattern.permute.xlu0 1
        %482 = vperm.xlu0 %481, %v411
        %v483 = vpop.permute.xlu0 %482
        %485 = vset.pattern.permute.xlu0 1
        %486 = vperm.xlu0 %485, %v412
        %v487 = vpop.permute.xlu0 %486
        %v489 = vsel %vm469, %v475, 0.0
        %v490 = vsel %vm470, %v479, 0.0
        %v491 = vsel %vm471, %v483, 0.0
        %v492 = vsel %vm472, %v487, 0.0
        %v493 = vadd.f32 %v453, %v489
        %v494 = vadd.f32 %v454, %v490
        %v495 = vadd.f32 %v455, %v491
        %v496 = vadd.f32 %v456, %v492
        %497 = vset.pattern.permute.xlu0 2
        %498 = vperm.xlu0 %497, %v405
        %v499 = vpop.permute.xlu0 %498
        %500 = vset.pattern.permute.xlu0 2
        %501 = vperm.xlu0 %500, %v406
        %v502 = vpop.permute.xlu0 %501
        %503 = vset.pattern.permute.xlu0 2
        %504 = vperm.xlu0 %503, %v407
        %v505 = vpop.permute.xlu0 %504
        %506 = vset.pattern.permute.xlu0 2
        %507 = vperm.xlu0 %506, %v408
        %v508 = vpop.permute.xlu0 %507
        %vm509 = vcmp.eq.s32.totalorder %v499, %v404
        %vm510 = vcmp.eq.s32.totalorder %v502, %v404
        %vm511 = vcmp.eq.s32.totalorder %v505, %v404
        %vm512 = vcmp.eq.s32.totalorder %v508, %v404
        %513 = vset.pattern.permute.xlu0 2
        %514 = vperm.xlu0 %513, %v409
        %v515 = vpop.permute.xlu0 %514
        %517 = vset.pattern.permute.xlu0 2
        %518 = vperm.xlu0 %517, %v410
        %v519 = vpop.permute.xlu0 %518
        %521 = vset.pattern.permute.xlu0 2
        %522 = vperm.xlu0 %521, %v411
        %v523 = vpop.permute.xlu0 %522
        %525 = vset.pattern.permute.xlu0 2
        %526 = vperm.xlu0 %525, %v412
        %v527 = vpop.permute.xlu0 %526
        %v529 = vsel %vm509, %v515, 0.0
        %v530 = vsel %vm510, %v519, 0.0
        %v531 = vsel %vm511, %v523, 0.0
        %v532 = vsel %vm512, %v527, 0.0
        %v533 = vadd.f32 %v493, %v529
        %v534 = vadd.f32 %v494, %v530
        %v535 = vadd.f32 %v495, %v531
        %v536 = vadd.f32 %v496, %v532
        %537 = vset.pattern.permute.xlu0 3
        %538 = vperm.xlu0 %537, %v405
        %v539 = vpop.permute.xlu0 %538
        %540 = vset.pattern.permute.xlu0 3
        %541 = vperm.xlu0 %540, %v406
        %v542 = vpop.permute.xlu0 %541
        %543 = vset.pattern.permute.xlu0 3
        %544 = vperm.xlu0 %543, %v407
        %v545 = vpop.permute.xlu0 %544
        %546 = vset.pattern.permute.xlu0 3
        %547 = vperm.xlu0 %546, %v408
        %v548 = vpop.permute.xlu0 %547
        %vm549 = vcmp.eq.s32.totalorder %v539, %v404
        %vm550 = vcmp.eq.s32.totalorder %v542, %v404
        %vm551 = vcmp.eq.s32.totalorder %v545, %v404
        %vm552 = vcmp.eq.s32.totalorder %v548, %v404
        %553 = vset.pattern.permute.xlu0 3
        %554 = vperm.xlu0 %553, %v409
        %v555 = vpop.permute.xlu0 %554
        %557 = vset.pattern.permute.xlu0 3
        %558 = vperm.xlu0 %557, %v410
        %v559 = vpop.permute.xlu0 %558
        %561 = vset.pattern.permute.xlu0 3
        %562 = vperm.xlu0 %561, %v411
        %v563 = vpop.permute.xlu0 %562
        %565 = vset.pattern.permute.xlu0 3
        %566 = vperm.xlu0 %565, %v412
        %v567 = vpop.permute.xlu0 %566
        %v569 = vsel %vm549, %v555, 0.0
        %v570 = vsel %vm550, %v559, 0.0
        %v571 = vsel %vm551, %v563, 0.0
        %v572 = vsel %vm552, %v567, 0.0
        %v573 = vadd.f32 %v533, %v569
        %v574 = vadd.f32 %v534, %v570
        %v575 = vadd.f32 %v535, %v571
        %v576 = vadd.f32 %v536, %v572
        %577 = vset.pattern.permute.xlu0 4
        %578 = vperm.xlu0 %577, %v405
        %v579 = vpop.permute.xlu0 %578
        %580 = vset.pattern.permute.xlu0 4
        %581 = vperm.xlu0 %580, %v406
        %v582 = vpop.permute.xlu0 %581
        %583 = vset.pattern.permute.xlu0 4
        %584 = vperm.xlu0 %583, %v407
        %v585 = vpop.permute.xlu0 %584
        %586 = vset.pattern.permute.xlu0 4
        %587 = vperm.xlu0 %586, %v408
        %v588 = vpop.permute.xlu0 %587
        %vm589 = vcmp.eq.s32.totalorder %v579, %v404
        %vm590 = vcmp.eq.s32.totalorder %v582, %v404
        %vm591 = vcmp.eq.s32.totalorder %v585, %v404
        %vm592 = vcmp.eq.s32.totalorder %v588, %v404
        %593 = vset.pattern.permute.xlu0 4
        %594 = vperm.xlu0 %593, %v409
        %v595 = vpop.permute.xlu0 %594
        %597 = vset.pattern.permute.xlu0 4
        %598 = vperm.xlu0 %597, %v410
        %v599 = vpop.permute.xlu0 %598
        %601 = vset.pattern.permute.xlu0 4
        %602 = vperm.xlu0 %601, %v411
        %v603 = vpop.permute.xlu0 %602
        %605 = vset.pattern.permute.xlu0 4
        %606 = vperm.xlu0 %605, %v412
        %v607 = vpop.permute.xlu0 %606
        %v609 = vsel %vm589, %v595, 0.0
        %v610 = vsel %vm590, %v599, 0.0
        %v611 = vsel %vm591, %v603, 0.0
        %v612 = vsel %vm592, %v607, 0.0
        %v613 = vadd.f32 %v573, %v609
        %v614 = vadd.f32 %v574, %v610
        %v615 = vadd.f32 %v575, %v611
        %v616 = vadd.f32 %v576, %v612
        %617 = vset.pattern.permute.xlu0 5
        %618 = vperm.xlu0 %617, %v405
        %v619 = vpop.permute.xlu0 %618
        %620 = vset.pattern.permute.xlu0 5
        %621 = vperm.xlu0 %620, %v406
        %v622 = vpop.permute.xlu0 %621
        %623 = vset.pattern.permute.xlu0 5
        %624 = vperm.xlu0 %623, %v407
        %v625 = vpop.permute.xlu0 %624
        %626 = vset.pattern.permute.xlu0 5
        %627 = vperm.xlu0 %626, %v408
        %v628 = vpop.permute.xlu0 %627
        %vm629 = vcmp.eq.s32.totalorder %v619, %v404
        %vm630 = vcmp.eq.s32.totalorder %v622, %v404
        %vm631 = vcmp.eq.s32.totalorder %v625, %v404
        %vm632 = vcmp.eq.s32.totalorder %v628, %v404
        %633 = vset.pattern.permute.xlu0 5
        %634 = vperm.xlu0 %633, %v409
        %v635 = vpop.permute.xlu0 %634
        %637 = vset.pattern.permute.xlu0 5
        %638 = vperm.xlu0 %637, %v410
        %v639 = vpop.permute.xlu0 %638
        %641 = vset.pattern.permute.xlu0 5
        %642 = vperm.xlu0 %641, %v411
        %v643 = vpop.permute.xlu0 %642
        %645 = vset.pattern.permute.xlu0 5
        %646 = vperm.xlu0 %645, %v412
        %v647 = vpop.permute.xlu0 %646
        %v649 = vsel %vm629, %v635, 0.0
        %v650 = vsel %vm630, %v639, 0.0
        %v651 = vsel %vm631, %v643, 0.0
        %v652 = vsel %vm632, %v647, 0.0
        %v653 = vadd.f32 %v613, %v649
        %v654 = vadd.f32 %v614, %v650
        %v655 = vadd.f32 %v615, %v651
        %v656 = vadd.f32 %v616, %v652
        %657 = vset.pattern.permute.xlu0 6
        %658 = vperm.xlu0 %657, %v405
        %v659 = vpop.permute.xlu0 %658
        %660 = vset.pattern.permute.xlu0 6
        %661 = vperm.xlu0 %660, %v406
        %v662 = vpop.permute.xlu0 %661
        %663 = vset.pattern.permute.xlu0 6
        %664 = vperm.xlu0 %663, %v407
        %v665 = vpop.permute.xlu0 %664
        %666 = vset.pattern.permute.xlu0 6
        %667 = vperm.xlu0 %666, %v408
        %v668 = vpop.permute.xlu0 %667
        %vm669 = vcmp.eq.s32.totalorder %v659, %v404
        %vm670 = vcmp.eq.s32.totalorder %v662, %v404
        %vm671 = vcmp.eq.s32.totalorder %v665, %v404
        %vm672 = vcmp.eq.s32.totalorder %v668, %v404
        %673 = vset.pattern.permute.xlu0 6
        %674 = vperm.xlu0 %673, %v409
        %v675 = vpop.permute.xlu0 %674
        %677 = vset.pattern.permute.xlu0 6
        %678 = vperm.xlu0 %677, %v410
        %v679 = vpop.permute.xlu0 %678
        %681 = vset.pattern.permute.xlu0 6
        %682 = vperm.xlu0 %681, %v411
        %v683 = vpop.permute.xlu0 %682
        %685 = vset.pattern.permute.xlu0 6
        %686 = vperm.xlu0 %685, %v412
        %v687 = vpop.permute.xlu0 %686
        %v689 = vsel %vm669, %v675, 0.0
        %v690 = vsel %vm670, %v679, 0.0
        %v691 = vsel %vm671, %v683, 0.0
        %v692 = vsel %vm672, %v687, 0.0
        %v693 = vadd.f32 %v653, %v689
        %v694 = vadd.f32 %v654, %v690
        %v695 = vadd.f32 %v655, %v691
        %v696 = vadd.f32 %v656, %v692
        %697 = vset.pattern.permute.xlu0 7
        %698 = vperm.xlu0 %697, %v405
        %v699 = vpop.permute.xlu0 %698
        %700 = vset.pattern.permute.xlu0 7
        %701 = vperm.xlu0 %700, %v406
        %v702 = vpop.permute.xlu0 %701
        %703 = vset.pattern.permute.xlu0 7
        %704 = vperm.xlu0 %703, %v407
        %v705 = vpop.permute.xlu0 %704
        %706 = vset.pattern.permute.xlu0 7
        %707 = vperm.xlu0 %706, %v408
        %v708 = vpop.permute.xlu0 %707
        %vm709 = vcmp.eq.s32.totalorder %v699, %v404
        %vm710 = vcmp.eq.s32.totalorder %v702, %v404
        %vm711 = vcmp.eq.s32.totalorder %v705, %v404
        %vm712 = vcmp.eq.s32.totalorder %v708, %v404
        %713 = vset.pattern.permute.xlu0 7
        %714 = vperm.xlu0 %713, %v409
        %v715 = vpop.permute.xlu0 %714
        %717 = vset.pattern.permute.xlu0 7
        %718 = vperm.xlu0 %717, %v410
        %v719 = vpop.permute.xlu0 %718
        %721 = vset.pattern.permute.xlu0 7
        %722 = vperm.xlu0 %721, %v411
        %v723 = vpop.permute.xlu0 %722
        %725 = vset.pattern.permute.xlu0 7
        %726 = vperm.xlu0 %725, %v412
        %v727 = vpop.permute.xlu0 %726
        %v729 = vsel %vm709, %v715, 0.0
        %v730 = vsel %vm710, %v719, 0.0
        %v731 = vsel %vm711, %v723, 0.0
        %v732 = vsel %vm712, %v727, 0.0
        %v733 = vadd.f32 %v693, %v729
        %v734 = vadd.f32 %v694, %v730
        %v735 = vadd.f32 %v695, %v731
        %v736 = vadd.f32 %v696, %v732
        %v737 = vld [vmem:[#allocation2] sm:$0xff]
        %v738 = vld [vmem:[#allocation2 + $0x8] sm:$0xff]
        %v739 = vld [vmem:[#allocation2 + $0x10] sm:$0xff]
        %v740 = vld [vmem:[#allocation2 + $0x18] sm:$0xff]
        %v741 = vld [vmem:[%s388] sm:$0xff]
        %v742 = vld [vmem:[%s388 + $0x8] sm:$0xff]
        %v743 = vld [vmem:[%s388 + $0x10] sm:$0xff]
        %v744 = vld [vmem:[%s388 + $0x18] sm:$0xff]
        %vm745 = vcmask 261120
        %v747 = vsel %vm745, %v733, 0
        %v750 = vsel %vm745, %v734, 0
        %v753 = vsel %vm745, %v735, 0
        %v756 = vsel %vm745, %v736, 0
        %758 = vmatprep.subr.mxu0 0.0
        %759 = vmatpush1.msra.mxu0 %v741
        %760 = vmatprep.subr.mxu0 0.0
        %761 = vmatpush1.msra.mxu0 %v742
        %762 = vmatprep.subr.mxu0 0.0
        %763 = vmatpush1.msra.mxu0 %v743
        %764 = vmatprep.subr.mxu0 0.0
        %765 = vmatpush1.msra.mxu0 %v744
        %766 = vmatprep.subr.mxu0 0.0
        %767 = vmatpush1.msra.mxu0 0.0
        %768 = vmatprep.subr.mxu0 0.0
        %769 = vmatpush1.msra.mxu0 0.0
        %770 = vmatprep.subr.mxu0 0.0
        %771 = vmatpush1.msra.mxu0 0.0
        %772 = vmatprep.subr.mxu0 0.0
        %773 = vmatpush1.msra.mxu0 0.0
        %774 = vmatprep.subr.mxu0 0.0
        %775 = vmatpush1.msra.mxu0 0.0
        %776 = vmatprep.subr.mxu0 0.0
        %777 = vmatpush1.msra.mxu0 0.0
        %778 = vmatprep.subr.mxu0 0.0
        %779 = vmatpush1.msra.mxu0 0.0
        %780 = vmatprep.subr.mxu0 0.0
        %781 = vmatpush1.msra.mxu0 0.0
        %782 = vmatprep.subr.mxu0 0.0
        %783 = vmatpush1.msra.mxu0 0.0
        %784 = vmatprep.subr.mxu0 0.0
        %785 = vmatpush1.msra.mxu0 0.0
        %786 = vmatprep.subr.mxu0 0.0
        %787 = vmatpush1.msra.mxu0 0.0
        %788 = vmatprep.subr.mxu0 0.0
        %789 = vmatpush1.msra.mxu0 0.0
        %790 = vmatprep.subr.mxu0 0.0
        %791 = vmatpush1.msra.mxu0 0.0
        %792 = vmatprep.subr.mxu0 0.0
        %793 = vmatpush1.msra.mxu0 0.0
        %794 = vmatprep.subr.mxu0 0.0
        %795 = vmatpush1.msra.mxu0 0.0
        %796 = vmatprep.subr.mxu0 0.0
        %797 = vmatpush1.msra.mxu0 0.0
        %798 = vmatprep.subr.mxu0 0.0
        %799 = vmatpush1.msra.mxu0 0.0
        %800 = vmatprep.subr.mxu0 0.0
        %801 = vmatpush1.msra.mxu0 0.0
        %802 = vmatprep.subr.mxu0 0.0
        %803 = vmatpush1.msra.mxu0 0.0
        %804 = vmatprep.subr.mxu0 0.0
        %805 = vmatpush1.msra.mxu0 0.0
        %806 = vmatprep.subr.mxu0 0.0
        %807 = vmatpush1.msra.mxu0 0.0
        %808 = vmatprep.subr.mxu0 0.0
        %809 = vmatpush1.msra.mxu0 0.0
        %810 = vmatprep.subr.mxu0 0.0
        %811 = vmatpush1.msra.mxu0 0.0
        %812 = vmatprep.subr.mxu0 0.0
        %813 = vmatpush1.msra.mxu0 0.0
        %814 = vmatprep.subr.mxu0 0.0
        %815 = vmatpush1.msra.mxu0 0.0
        %816 = vmatprep.subr.mxu0 0.0
        %817 = vmatpush1.msra.mxu0 0.0
        %818 = vmatprep.subr.mxu0 0.0
        %819 = vmatpush1.msra.mxu0 0.0
        %820 = vmatprep.subr.mxu0 0.0
        %821 = vmatpush1.msra.mxu0 0.0
        %822 = vmatprep.mubr.f32.mxu0 0.0
        %823 = vmatmul.mubr.f32.gmra.mrb[0].mxu0 %v747
        %v824 = vpop.f32.mrb[0].mxu0
        %v825 = vadd.f32 0.0, %v824
        %v826 = vpop.f32.mrb[0].mxu0
        %827 = vmatprep.mubr.f32.mxu0 0.0
        %828 = vmatmul.mubr.f32.gmra.mrb[0].mxu0 %v750
        %v829 = vpop.f32.mrb[0].mxu0
        %v830 = vadd.f32 0.0, %v829
        %v831 = vpop.f32.mrb[0].mxu0
        %832 = vmatprep.mubr.f32.mxu0 0.0
        %833 = vmatmul.mubr.f32.gmra.mrb[0].mxu0 %v753
        %v834 = vpop.f32.mrb[0].mxu0
        %v835 = vadd.f32 0.0, %v834
        %v836 = vpop.f32.mrb[0].mxu0
        %837 = vmatprep.mubr.f32.mxu0 0.0
        %838 = vmatmul.mubr.f32.gmra.mrb[0].mxu0 %v756
        %v839 = vpop.f32.mrb[0].mxu0
        %v840 = vadd.f32 0.0, %v839
        %v841 = vpop.f32.mrb[0].mxu0
        %842 = vdwg.mxu0
        %v843 = vadd.f32 %v737, %v825
        %v844 = vadd.f32 %v738, %v830
        %v845 = vadd.f32 %v739, %v835
        %v846 = vadd.f32 %v740, %v840
        %847 = vst [vmem:[#allocation2] sm:$0xff] %v843
        %848 = vst [vmem:[#allocation2 + $0x8] sm:$0xff] %v844
        %849 = vst [vmem:[#allocation2 + $0x10] sm:$0xff] %v845
        %850 = vst [vmem:[#allocation2 + $0x18] sm:$0xff] %v846
        %p851 = scmp.eq.s32.totalorder %s30, 2
        // Predicated region
        $region49: #{tpu_custom_call.1} parent=43 // pred_check
          %p852 = pneg %p851
        $region50: #{tpu_custom_call.1} parent=43 // pred_check_branch
          %854 = sbr.rel (%p852) target = $region52
        $region51: #{tpu_custom_call.1} parent=43 // pred_region
          %v855 = vld [vmem:[%s5] sm:$0x1]
          %v856 = vld [vmem:[#allocation2] sm:$0xff]
          %v857 = vld [vmem:[#allocation2 + $0x8] sm:$0xff]
          %v858 = vld [vmem:[#allocation2 + $0x10] sm:$0xff]
          %v859 = vld [vmem:[#allocation2 + $0x18] sm:$0xff]
          %v861 = vlaneseq
          %v862 = vshrl.u32 %v861, 7
          %v863 = vsub.s32 0, %v862
          %v864 = vrot.slane %v855, %v863
          %v866 = vadd.f32 %v856, %v864
          %v867 = vadd.f32 %v857, %v864
          %868 = vst [vmem:[%s352] sm:$0xff] %v866
          %869 = vst [vmem:[%s352 + $0x8] sm:$0xff] %v867
          %v870 = vadd.f32 %v858, %v864
          %v871 = vadd.f32 %v859, %v864
          %872 = vst [vmem:[%s359] sm:$0xff] %v870
          %873 = vst [vmem:[%s359 + $0x8] sm:$0xff] %v871
        $region52: #{tpu_custom_call.1} parent=43 // pred_fallthru
          _
        %s874 = sand.u32 %s196, 1
        %s875 = scalar_lea.sflag [#allocation4], %s874
        %s876 = sand.u32 %s196, 1
        %s877 = smul.addr %s876, 16
        %s878 = scalar_lea.vmem [#allocation3], %s877
        %s879 = sand.u32 %s222, 1
        %s880 = scalar_lea.sflag [#allocation6], %s879
        %s881 = sand.u32 %s222, 1
        %s882 = smul.addr %s881, 16
        %s883 = scalar_lea.vmem [#allocation5], %s882
        // Predicated region
        $region53: #{tpu_custom_call.1} parent=43 // pred_check
          %p884 = pneg %p206
        $region54: #{tpu_custom_call.1} parent=43 // pred_check_branch
          %886 = sbr.rel (%p884) target = $region56
        $region55: #{tpu_custom_call.1} parent=43 // pred_region
          %s887 = smul.u32 2, %s29
          %s889 = ssub.s32 256, 256
          %890 = vsyncadd %s875, %s889
          %s891 = smul.addr %s887, 128
          %s892 = scalar_lea.hbm %s6, %s891
          %s893 = sshll.u32 %s878, 4
          %s894 = int_to_ptr.vmem [resolvable:$true] %s893
          %899 = dma.vmem_to_hbm [thread:$0]  %s894, 256, %s892, %s875, 128, 128, 8
        $region56: #{tpu_custom_call.1} parent=43 // pred_fallthru
          _
        // Predicated region
        $region57: #{tpu_custom_call.1} parent=43 // pred_check
          %p900 = pneg %p232
        $region58: #{tpu_custom_call.1} parent=43 // pred_check_branch
          %902 = sbr.rel (%p900) target = $region60
        $region59: #{tpu_custom_call.1} parent=43 // pred_region
          %s903 = smul.u32 2, %s29
          %s905 = ssub.s32 256, 256
          %906 = vsyncadd %s880, %s905
          %s907 = smul.addr %s903, 128
          %s908 = scalar_lea.hbm %s7, %s907
          %s909 = sshll.u32 %s883, 4
          %s910 = int_to_ptr.vmem [resolvable:$true] %s909
          %915 = dma.vmem_to_hbm [thread:$0]  %s910, 256, %s908, %s880, 128, 128, 8
        $region60: #{tpu_custom_call.1} parent=43 // pred_fallthru
          _
      $region44: #{tpu_custom_call.1} parent=5 // pred_fallthru
        _
      %p916 = scmp.le.s32.totalorder 2, %s20
      // Predicated region
      $region61: #{tpu_custom_call.1} parent=5 // pred_check
        %p917 = pneg %p916
      $region62: #{tpu_custom_call.1} parent=5 // pred_check_branch
        %919 = sbr.rel (%p917) target = $region64
      $region63: #{tpu_custom_call.1} parent=5 // pred_region
        %s920 = ssub.s32 %s20, 2
        // Predicated region
        $region65: #{tpu_custom_call.1} parent=63 // pred_check
          %p921 = pneg %p212
        $region66: #{tpu_custom_call.1} parent=63 // pred_check_branch
          %923 = sbr.rel (%p921) target = $region68
        $region67: #{tpu_custom_call.1} parent=63 // pred_region
          %s924 = sand.u32 %s197, 1
          %s925 = scalar_lea.sflag [#allocation4], %s924
          %s926 = sand.u32 %s197, 1
          %s927 = smul.addr %s926, 16
          %s928 = scalar_lea.vmem [#allocation3], %s927
          %929 = dma.done %s925, 256
        $region68: #{tpu_custom_call.1} parent=63 // pred_fallthru
          _
        // Predicated region
        $region69: #{tpu_custom_call.1} parent=63 // pred_check
          %p930 = pneg %p238
        $region70: #{tpu_custom_call.1} parent=63 // pred_check_branch
          %932 = sbr.rel (%p930) target = $region72
        $region71: #{tpu_custom_call.1} parent=63 // pred_region
          %s933 = sand.u32 %s223, 1
          %s934 = scalar_lea.sflag [#allocation6], %s933
          %s935 = sand.u32 %s223, 1
          %s936 = smul.addr %s935, 16
          %s937 = scalar_lea.vmem [#allocation5], %s936
          %938 = dma.done %s934, 256
        $region72: #{tpu_custom_call.1} parent=63 // pred_fallthru
          _
      $region64: #{tpu_custom_call.1} parent=5 // pred_fallthru
        _
    $region6: #{tpu_custom_call.1} parent=1 // loop_footer
      %s24 = sadd.s32 1, %s20
    $region7: #{tpu_custom_call.1} parent=1 // loop_footer_branch
      %19 = sbr.rel target = $region3
    $region8: #{tpu_custom_call.1} parent=1 // loop_exit
      _
    %939 = vsyncpa [#allocation4], 1
    %s940 = scalar_lea.sflag [#allocation4], 1
    %941 = vsyncpa %s940, 1
    %942 = vsyncpa [#allocation6], 1
    %s943 = scalar_lea.sflag [#allocation6], 1
    %944 = vsyncpa %s943, 1

</llo_original>
